<compile_context>
chip_gen: v6e
topology: v6e:2x2x1
jax: 0.10.0
libtpu: 0.0.40
codegen_flags: <defaults>
</compile_context>

<pallas_src>
import functools
import math

import jax
import jax.numpy as jnp
from jax.experimental import pallas as pl
from jax.experimental.pallas import tpu as pltpu

VARIANCE_EPSILON = 1e-10          # Normalizer.__init__ default
_MIN_PALLAS_BYTES = 1 << 20       # below this, pure JAX (launch overhead dominates)


def _round_up(x, m):
    return ((x + m - 1) // m) * m


def _vmem_capacity_bytes():
    """Per-core VMEM capacity; conservative fallback if query unavailable."""
    try:
        info = pltpu.get_tpu_info()
        cap = getattr(info, "vmem_capacity_bytes", None)
        if cap:
            return int(cap)
    except Exception:
        pass
    return 64 << 20   # v7x per-TC size (safe lower bound for all generations)


def _is_v5e():
    """v5e has no bf16 VALU/EUP — keep f32 compute there."""
    try:
        kind = jax.devices()[0].device_kind.lower()
        return ("v5 lite" in kind) or ("v5lite" in kind) or ("v5e" in kind)
    except Exception:
        return False


def _normalizer_kernel(x_ref, mean_ref, scale_ref, o_ref, *, clip_value,
                       compute_dtype):
    """Streaming normalize: out = (x - mean) * inv_std, optional clip.

    x_ref     : (TR, TW) tile of the (batch-squashed, lane-packed) input
    mean_ref  : (1, TW)  resident mean row (tiled to packed width), compute dtype
    scale_ref : (1, TW)  resident inv_std row, compute dtype
    o_ref     : (TR, TW) output tile
    """
    x = x_ref[...].astype(compute_dtype)
    out = (x - mean_ref[...]) * scale_ref[...]     # (1,TW) broadcasts over rows
    if clip_value > 0.0:
        out = jnp.clip(out, -clip_value, clip_value)
    o_ref[...] = out.astype(o_ref.dtype)


def _normalize_rows_jax(rows, mean32, inv_std, clip_value, out_dtype):
    """Pure-JAX normalize for tiny inputs / leftover (< g) rows."""
    out = (rows.astype(jnp.float32) - mean32) * inv_std
    if float(clip_value) > 0.0:
        out = jnp.clip(out, -clip_value, clip_value)
    return out.astype(out_dtype)


def _pallas_normalize_2d(xf, mean_row, scale_row, *, clip_value, compute_dtype):
    """Run the streaming kernel over a (R, W) array; W is a multiple of 128."""
    R, W = xf.shape
    itemsize = jnp.dtype(xf.dtype).itemsize
    # dtype-aware sublane alignment: f32 -> 8, bf16 -> 16, int8/fp8 -> 32
    align = max(8, 32 // itemsize)

    # Generation-aware budgets (v7x: 64 MiB/TC; v5e/v6e: 128 MiB).
    vmem_cap = _vmem_capacity_bytes()
    vmem_limit = max(32 << 20, min(int(vmem_cap * 0.85), 96 << 20))
    target_tile = max(2 << 20, min(10 << 20, vmem_limit // 5))

    # Guard very wide rows with a second grid axis over W (tile_w mult. of 128).
    if W > 128 and align * W * itemsize > target_tile:
        tile_w = max(128, (target_tile // (align * itemsize)) // 128 * 128)
        tile_w = min(tile_w, W)
    else:
        tile_w = W

    bytes_per_row = tile_w * itemsize
    tile_rows = max(align, (target_tile // max(bytes_per_row, 1)) // align * align)
    # Keep >= ~8 row steps on large inputs (megacore sharding + pipelining).
    row_cap = max(align, _round_up(pl.cdiv(R, 8), align))
    tile_rows = min(tile_rows, row_cap)
    if tile_rows >= R:
        tile_rows = R          # single full-extent row block (always legal)

    grid = (pl.cdiv(R, tile_rows), pl.cdiv(W, tile_w))

    kernel = functools.partial(_normalizer_kernel,
                               clip_value=float(clip_value),
                               compute_dtype=compute_dtype)

    return pl.pallas_call(
        kernel,
        out_shape=jax.ShapeDtypeStruct((R, W), xf.dtype),
        grid=grid,
        in_specs=[
            pl.BlockSpec((tile_rows, tile_w), lambda i, j: (i, j)),   # x tile
            pl.BlockSpec((1, tile_w), lambda i, j: (0, j)),           # mean row
            pl.BlockSpec((1, tile_w), lambda i, j: (0, j)),           # scale row
        ],
        out_specs=pl.BlockSpec((tile_rows, tile_w), lambda i, j: (i, j)),
        compiler_params=pltpu.CompilerParams(
            dimension_semantics=("parallel", "parallel"),
            vmem_limit_bytes=int(vmem_limit)),
    )(xf, mean_row, scale_row)


def normalizer_forward(x, mean, m2, *, clip_value=-1.0, eps=VARIANCE_EPSILON,
                       min_pallas_bytes=_MIN_PALLAS_BYTES):
    """Eval-mode forward of Normalizer (zero_mean=True, unit_std=False).

    Args:
      x:    array of shape [B1, ..., Bk, D] (arbitrary outer dims + spec shape)
      mean: array of shape [D]  (first-moment averager state)
      m2:   array of shape [D]  (second-moment averager state)
      clip_value: if > 0, clip normalized values to [-clip_value, clip_value]
      min_pallas_bytes: inputs smaller than this go through pure JAX.
    Returns:
      normalized array with the same shape and dtype as x.
    """
    orig_shape = x.shape
    D = int(mean.shape[-1])
    assert orig_shape[-1] == D, "last dim of x must match tensor_spec shape"

    # ---- O(D) stat math in float32 (wrapper, not per grid step) ------------
    mean32 = mean.astype(jnp.float32)
    m2_32 = m2.astype(jnp.float32)
    var = jnp.maximum(m2_32 - mean32 * mean32, 0.0)     # relu(m2 - mean^2)
    inv_std = jax.lax.rsqrt(var + jnp.float32(eps))

    # ---- BatchSquash: flatten outer dims (metadata-only reshape) -----------
    B = 1
    for s in orig_shape[:-1]:
        B *= int(s)
    if B == 0 or D == 0:
        return x                                         # empty batch guard

    itemsize = jnp.dtype(x.dtype).itemsize

    # ---- Tiny-input bypass: launch overhead dominates, XLA fuses this ------
    if B * D * itemsize < min_pallas_bytes:
        out = _normalize_rows_jax(x.reshape(B, D), mean32, inv_std,
                                  clip_value, x.dtype)
        return out.reshape(orig_shape)

    # ---- Compute dtype: native bf16 on chips with bf16 VPU, else f32 -------
    compute_dtype = jnp.float32
    if x.dtype == jnp.bfloat16 and not _is_v5e():
        compute_dtype = jnp.bfloat16

    xf = x.reshape(B, D)

    # ---- Lane-dense packing with real fallback ------------------------------
    # g*D is a multiple of 128; any leftover rows (< g) go through pure JAX.
    g = 1
    if D % 128 != 0:
        g = 128 // math.gcd(D, 128)
    B_main = (B // g) * g
    B_rem = B - B_main

    if B_main == 0:
        # Fewer rows than one packing group — pure JAX (tiny).
        out = _normalize_rows_jax(xf, mean32, inv_std, clip_value, x.dtype)
        return out.reshape(orig_shape)

    W = g * D
    mean_row = jnp.tile(mean32, g).reshape(1, W).astype(compute_dtype)
    scale_row = jnp.tile(inv_std, g).reshape(1, W).astype(compute_dtype)

    x_main = xf[:B_main].reshape(B_main // g, W)         # contiguous reshape
    out_main = _pallas_normalize_2d(x_main, mean_row, scale_row,
                                    clip_value=clip_value,
                                    compute_dtype=compute_dtype)
    out_main = out_main.reshape(B_main, D)

    if B_rem:
        out_rem = _normalize_rows_jax(xf[B_main:], mean32, inv_std,
                                      clip_value, x.dtype)
        out = jnp.concatenate([out_main, out_rem], axis=0)
    else:
        out = out_main
    return out.reshape(orig_shape)


def normalizer_forward_ref(x, mean, m2, *, clip_value=-1.0,
                           eps=VARIANCE_EPSILON):
    """Pure-JAX reference of Normalizer._normalize (for verification)."""
    mean32 = mean.astype(jnp.float32)
    m2_32 = m2.astype(jnp.float32)
    var = jnp.maximum(m2_32 - mean32 * mean32, 0.0)
    out = (x.astype(jnp.float32) - mean32) * jax.lax.rsqrt(var + eps)
    if clip_value > 0.0:
        out = jnp.clip(out, -clip_value, clip_value)
    return out.astype(x.dtype)


if __name__ == "__main__":
    def make_stats(k_m, k_s, D):
        # Deterministic "averager" state: mean and second moment with m2 >= m^2.
        mean = jax.random.normal(k_m, (D,), dtype=jnp.float32) * 0.5
        m2 = mean * mean + jnp.abs(
            jax.random.normal(k_s, (D,), dtype=jnp.float32)) + 0.25
        return mean, m2

    key = jax.random.PRNGKey(0)
    k_x, k_m, k_s = jax.random.split(key, 3)

    # Case 1: small module-like shape [2, 4, 16, 32] — default path (tiny-input
    # bypass, pure JAX), un-clipped.
    shape = (2, 4, 16, 32)
    D = shape[-1]
    x = jax.random.normal(k_x, shape, dtype=jnp.float32) * 2.0 + 1.0
    mean, m2 = make_stats(k_m, k_s, D)
    out = jax.block_until_ready(normalizer_forward(x, mean, m2))
    ref = normalizer_forward_ref(x, mean, m2)
    assert out.shape == x.shape and out.dtype == x.dtype
    assert jnp.allclose(out, ref, rtol=1e-5, atol=1e-5), "bypass mismatch"

    # Case 2: same shape forced through the Pallas kernel (D=32 packs with
    # g=4 -> W=128, B=128 divisible by g, no split), clipped path.
    out_k = jax.block_until_ready(
        normalizer_forward(x, mean, m2, clip_value=1.5, min_pallas_bytes=0))
    ref_k = normalizer_forward_ref(x, mean, m2, clip_value=1.5)
    assert jnp.allclose(out_k, ref_k, rtol=1e-5, atol=1e-5), "kernel mismatch"

    # Case 3: D=33 (not lane-aligned), B=130 not divisible by g=128 ->
    # split fast path (128 packed rows through the kernel) + 2 leftover rows
    # via pure JAX, then concatenated.
    shape3 = (2, 5, 13, 33)
    k_x3, k_m3, k_s3 = jax.random.split(jax.random.PRNGKey(1), 3)
    x3 = jax.random.normal(k_x3, shape3, dtype=jnp.float32)
    mean3, m23 = make_stats(k_m3, k_s3, shape3[-1])
    out3 = jax.block_until_ready(
        normalizer_forward(x3, mean3, m23, min_pallas_bytes=0))
    ref3 = normalizer_forward_ref(x3, mean3, m23)
    assert out3.shape == x3.shape
    assert jnp.allclose(out3, ref3, rtol=1e-5, atol=1e-5), "split mismatch"

    # Case 4: bf16 input, lane-aligned D=128 (native bf16 compute on v6e/v7x,
    # f32 compute on v5e), clipped path. Loose tolerance for bf16 arithmetic.
    shape4 = (64, 128)
    k_x4, k_m4, k_s4 = jax.random.split(jax.random.PRNGKey(2), 3)
    x4 = jax.random.normal(k_x4, shape4, dtype=jnp.float32).astype(jnp.bfloat16)
    mean4, m24 = make_stats(k_m4, k_s4, shape4[-1])
    out4 = jax.block_until_ready(
        normalizer_forward(x4, mean4, m24, clip_value=3.0, min_pallas_bytes=0))
    ref4 = normalizer_forward_ref(x4, mean4, m24, clip_value=3.0)
    assert out4.shape == x4.shape and out4.dtype == jnp.bfloat16
    assert jnp.allclose(out4.astype(jnp.float32), ref4.astype(jnp.float32),
                        rtol=0.05, atol=0.1), "bf16 mismatch"

    print("KERNEL_OK")
</pallas_src>

<mosaic_0001>
module attributes {stable_mosaic.version = 11 : i64} {
  func.func @_normalizer_kernel(%arg0: i32, %arg1: i32, %arg2: memref<8x128xf32, #tpu.memory_space<vmem>>, %arg3: memref<1x128xf32, #tpu.memory_space<vmem>>, %arg4: memref<1x128xf32, #tpu.memory_space<vmem>>, %arg5: memref<8x128xf32, #tpu.memory_space<vmem>>) attributes {dimension_semantics = [#tpu.dimension_semantics<parallel>, #tpu.dimension_semantics<parallel>], iteration_bounds = array<i64: 4, 1>, scalar_prefetch = 0 : i64, scratch_operands = 0 : i64, tpu.core_type = #tpu.core_type<tc>, window_params = [{transform_indices = @transform_0, window_bounds = array<i64: 8, 128>}, {transform_indices = @transform_1, window_bounds = array<i64: 1, 128>}, {transform_indices = @transform_2, window_bounds = array<i64: 1, 128>}, {transform_indices = @transform_3, window_bounds = array<i64: 8, 128>}]} {
    %c0 = arith.constant 0 : index
    %c0_0 = arith.constant 0 : index
    %0 = vector.load %arg2[%c0, %c0_0] : memref<8x128xf32, #tpu.memory_space<vmem>>, vector<8x128xf32>
    %c0_1 = arith.constant 0 : index
    %c0_2 = arith.constant 0 : index
    %1 = vector.load %arg3[%c0_1, %c0_2] : memref<1x128xf32, #tpu.memory_space<vmem>>, vector<1x128xf32>
    %2 = vector.broadcast %1 : vector<1x128xf32> to vector<8x128xf32>
    %3 = arith.subf %0, %2 : vector<8x128xf32>
    %c0_3 = arith.constant 0 : index
    %c0_4 = arith.constant 0 : index
    %4 = vector.load %arg4[%c0_3, %c0_4] : memref<1x128xf32, #tpu.memory_space<vmem>>, vector<1x128xf32>
    %5 = vector.broadcast %4 : vector<1x128xf32> to vector<8x128xf32>
    %6 = arith.mulf %3, %5 : vector<8x128xf32>
    %cst = arith.constant -1.500000e+00 : f32
    %cst_5 = arith.constant 1.500000e+00 : f32
    %7 = vector.broadcast %cst : f32 to vector<8x128xf32>
    %8 = arith.maximumf %7, %6 : vector<8x128xf32>
    %9 = vector.broadcast %cst_5 : f32 to vector<8x128xf32>
    %10 = arith.minimumf %9, %8 : vector<8x128xf32>
    %c0_6 = arith.constant 0 : index
    %c0_7 = arith.constant 0 : index
    %11 = vector.load %arg5[%c0_6, %c0_7] : memref<8x128xf32, #tpu.memory_space<vmem>>, vector<8x128xf32>
    tpu.vector_store %arg5[%c0_6, %c0_7], %10 {strides = array<i32>} : memref<8x128xf32, #tpu.memory_space<vmem>>, vector<8x128xf32>,
    return
  }
  func.func @transform_0(%arg0: i32, %arg1: i32) -> (i32, i32) {
    %c0_i32 = arith.constant 0 : i32
    return %arg0, %arg1 : i32, i32
  }
  func.func @transform_1(%arg0: i32, %arg1: i32) -> (i32, i32) {
    %c0_i32 = arith.constant 0 : i32
    %c0_i32_0 = arith.constant 0 : i32
    return %c0_i32, %arg1 : i32, i32
  }
  func.func @transform_2(%arg0: i32, %arg1: i32) -> (i32, i32) {
    %c0_i32 = arith.constant 0 : i32
    %c0_i32_0 = arith.constant 0 : i32
    return %c0_i32, %arg1 : i32, i32
  }
  func.func @transform_3(%arg0: i32, %arg1: i32) -> (i32, i32) {
    %c0_i32 = arith.constant 0 : i32
    return %arg0, %arg1 : i32, i32
  }
}

</mosaic_0001>

<llo_original>
// kernel: tpu_custom_call.1
$region0: #{tpu_custom_call.1}
  #allocation0 [shape = 'u32[]', space=smem, size = 0x4, offset = 0x4, fixed_abs, tag = 'smem constant byte address 0x4 - core index']
  #allocation1 [shape = 'u32[144,128]{1,0:T(1,128)}', space=vmem, size = 0x12000, scoped, tag = 'internal scratch']
  %s0 = inlined_call_operand.hbm [shape: f32[32,128], index: 0, kind: input, shape index: {}]
  %s1 = inlined_call_operand.vmem [shape: f32[1,128], index: 1, kind: input, shape index: {}]
  %s2 = inlined_call_operand.vmem [shape: f32[1,128], index: 2, kind: input, shape index: {}]
  %s3 = inlined_call_operand.hbm [shape: f32[32,128], index: 3, kind: output, shape index: {}]
  %s4 = sld [smem:[#allocation0]]
  $region49: #{tpu_custom_call.1} parent=0
    _
  %s6 = ssub.s32 1, %s4
  %s7 = scalar_select 0, %s6, %s4
  $region1: #{tpu_custom_call.1} parent=0
    #allocation2 [shape = 'u8[8192]{0}', space=vmem, size = 0x2000, scoped, tag = 'input window, operand 0']
    #allocation3 [shape = 's32[2]{0}', space=sflag, size = 0x8, scoped, tag = 'scoped memory for tpu_custom_call.1']
    #allocation4 [shape = 's32[2]{0}', space=sflag, size = 0x8, scoped, tag = 'scoped memory for tpu_custom_call.1']
    #allocation5 [shape = 'u8[8192]{0}', space=vmem, size = 0x2000, scoped, tag = 'output window, operand 0']
    %8 = vsyncpa [#allocation3], 0
    %s9 = scalar_lea.sflag [#allocation3], 1
    %10 = vsyncpa %s9, 0
    %11 = vsyncpa [#allocation4], 0
    %s12 = scalar_lea.sflag [#allocation4], 1
    %13 = vsyncpa %s12, 0
    loop: start=0, step=1, limit=6
    $region2: #{tpu_custom_call.1} parent=1 // loop_pre_header
      _
    $region3: #{tpu_custom_call.1} parent=1 // loop_header
      %s15 = sphi 0, %s19
      %p16 = scmp.ge.s32.totalorder %s15, 6
      %s22 = sphi 0, %s34
      %s23 = sphi 0, %s30
      %s24 = sphi 0, %s22
      %s25 = sphi 0, %s23
      %s26 = sphi 0, %s24
      %s27 = sphi 0, %s25
      %s39 = sphi 0, %s41
      %s42 = sphi 0, %s39
      %s43 = sphi 0, %s42
      %s59 = sphi 0, %s43
      %s65 = sphi 0, %s67
      %s68 = sphi 0, %s65
      %s69 = sphi 0, %s68
      %s85 = sphi 0, %s69
      %s91 = sphi 0, %s93
      %s94 = sphi 0, %s91
      %s95 = sphi 0, %s94
      %s111 = sphi 0, %s95
      %s119 = sphi 0, %s121
      %s122 = sphi 0, %s119
      %s123 = sphi 0, %s122
      %s139 = sphi 0, %s123
    $region4: #{tpu_custom_call.1} parent=1 // loop_header_branch
      %18 = sbr.rel (%p16) target = $region8
    $region5: #{tpu_custom_call.1} parent=1 // loop_body
      %s20 = ssub.s32 %s15, 1
      %s21 = ssub.s32 %s15, 2
      %s28 = sadd.s32 1, %s23
      %p29 = scmp.ge.s32.totalorder %s28, 1
      %s30 = scalar_select %p29, 0, %s28
      %s31 = sadd.s32 1, %s22
      %s32 = scalar_select %p29, %s31, %s22
      %p33 = scmp.ge.s32.totalorder %s32, 4
      %s34 = scalar_select %p33, 0, %s32
      %s35 = ssub.s32 %s22, %s34
      %s36 = ssub.s32 %s23, %s30
      %s37 = sor.u32 %s35, %s36
      %p38 = scmp.eq.s32.totalorder %s37, 0
      %s40 = sadd.s32 %s39, 1
      %s41 = scalar_select %p38, %s39, %s40
      %p44 = pneg %p38
      %p45 = scmp.eq.s32.totalorder %s15, 3
      %p46 = por %p44, %p45
      %p47 = scmp.ne.s32.totalorder %s39, %s42
      %p48 = scmp.eq.s32.totalorder %s15, 0
      %p49 = por %p47, %p48
      %p50 = scmp.ne.s32.totalorder %s39, %s42
      %p51 = scmp.eq.s32.totalorder %s20, 3
      %p52 = por %p50, %p51
      %p53 = scmp.ne.s32.totalorder %s42, %s43
      %p54 = scmp.eq.s32.totalorder %s20, 0
      %p55 = por %p53, %p54
      %p56 = scmp.ne.s32.totalorder %s42, %s43
      %p57 = scmp.eq.s32.totalorder %s21, 3
      %p58 = por %p56, %p57
      %p60 = scmp.ne.s32.totalorder %s43, %s59
      %p61 = scmp.eq.s32.totalorder %s21, 0
      %p62 = por %p60, %p61
      %s63 = ssub.s32 %s23, %s30
      %p64 = scmp.eq.s32.totalorder %s63, 0
      %s66 = sadd.s32 %s65, 1
      %s67 = scalar_select %p64, %s65, %s66
      %p70 = pneg %p64
      %p71 = scmp.eq.s32.totalorder %s15, 3
      %p72 = por %p70, %p71
      %p73 = scmp.ne.s32.totalorder %s65, %s68
      %p74 = scmp.eq.s32.totalorder %s15, 0
      %p75 = por %p73, %p74
      %p76 = scmp.ne.s32.totalorder %s65, %s68
      %p77 = scmp.eq.s32.totalorder %s20, 3
      %p78 = por %p76, %p77
      %p79 = scmp.ne.s32.totalorder %s68, %s69
      %p80 = scmp.eq.s32.totalorder %s20, 0
      %p81 = por %p79, %p80
      %p82 = scmp.ne.s32.totalorder %s68, %s69
      %p83 = scmp.eq.s32.totalorder %s21, 3
      %p84 = por %p82, %p83
      %p86 = scmp.ne.s32.totalorder %s69, %s85
      %p87 = scmp.eq.s32.totalorder %s21, 0
      %p88 = por %p86, %p87
      %s89 = ssub.s32 %s23, %s30
      %p90 = scmp.eq.s32.totalorder %s89, 0
      %s92 = sadd.s32 %s91, 1
      %s93 = scalar_select %p90, %s91, %s92
      %p96 = pneg %p90
      %p97 = scmp.eq.s32.totalorder %s15, 3
      %p98 = por %p96, %p97
      %p99 = scmp.ne.s32.totalorder %s91, %s94
      %p100 = scmp.eq.s32.totalorder %s15, 0
      %p101 = por %p99, %p100
      %p102 = scmp.ne.s32.totalorder %s91, %s94
      %p103 = scmp.eq.s32.totalorder %s20, 3
      %p104 = por %p102, %p103
      %p105 = scmp.ne.s32.totalorder %s94, %s95
      %p106 = scmp.eq.s32.totalorder %s20, 0
      %p107 = por %p105, %p106
      %p108 = scmp.ne.s32.totalorder %s94, %s95
      %p109 = scmp.eq.s32.totalorder %s21, 3
      %p110 = por %p108, %p109
      %p112 = scmp.ne.s32.totalorder %s95, %s111
      %p113 = scmp.eq.s32.totalorder %s21, 0
      %p114 = por %p112, %p113
      %s115 = ssub.s32 %s22, %s34
      %s116 = ssub.s32 %s23, %s30
      %s117 = sor.u32 %s115, %s116
      %p118 = scmp.eq.s32.totalorder %s117, 0
      %s120 = sadd.s32 %s119, 1
      %s121 = scalar_select %p118, %s119, %s120
      %p124 = pneg %p118
      %p125 = scmp.eq.s32.totalorder %s15, 3
      %p126 = por %p124, %p125
      %p127 = scmp.ne.s32.totalorder %s119, %s122
      %p128 = scmp.eq.s32.totalorder %s15, 0
      %p129 = por %p127, %p128
      %p130 = scmp.ne.s32.totalorder %s119, %s122
      %p131 = scmp.eq.s32.totalorder %s20, 3
      %p132 = por %p130, %p131
      %p133 = scmp.ne.s32.totalorder %s122, %s123
      %p134 = scmp.eq.s32.totalorder %s20, 0
      %p135 = por %p133, %p134
      %p136 = scmp.ne.s32.totalorder %s122, %s123
      %p137 = scmp.eq.s32.totalorder %s21, 3
      %p138 = por %p136, %p137
      %p140 = scmp.ne.s32.totalorder %s123, %s139
      %p141 = scmp.eq.s32.totalorder %s21, 0
      %p142 = por %p140, %p141
      %p143 = scmp.le.s32.totalorder 1, %s15
      %p144 = scmp.lt.s32.totalorder %s15, 5
      %p145 = pnand %p143, %p144
      %p146 = pneg %p145
      // Predicated region
      $region9: #{tpu_custom_call.1} parent=5 // pred_check
        _
      $region10: #{tpu_custom_call.1} parent=5 // pred_check_branch
        %148 = sbr.rel (%p145) target = $region12
      $region11: #{tpu_custom_call.1} parent=5 // pred_region
        %s149 = ssub.s32 %s15, 1
        // Predicated region
        $region13: #{tpu_custom_call.1} parent=11 // pred_check
          %p150 = pneg %p81
        $region14: #{tpu_custom_call.1} parent=11 // pred_check_branch
          %152 = sbr.rel (%p150) target = $region16
        $region15: #{tpu_custom_call.1} parent=11 // pred_region
          %p153 = scmp.lt.s32.totalorder %s25, 0
          %s154 = scalar_select %p153, %s25, 0
          %s155 = scalar_lea.vmem %s1, %s154
        $region16: #{tpu_custom_call.1} parent=11 // pred_fallthru
          _
        // Predicated region
        $region17: #{tpu_custom_call.1} parent=11 // pred_check
          %p156 = pneg %p107
        $region18: #{tpu_custom_call.1} parent=11 // pred_check_branch
          %158 = sbr.rel (%p156) target = $region20
        $region19: #{tpu_custom_call.1} parent=11 // pred_region
          %p159 = scmp.lt.s32.totalorder %s25, 0
          %s160 = scalar_select %p159, %s25, 0
          %s161 = scalar_lea.vmem %s2, %s160
        $region20: #{tpu_custom_call.1} parent=11 // pred_fallthru
          _
      $region12: #{tpu_custom_call.1} parent=5 // pred_fallthru
        _
      %p162 = scmp.lt.s32.totalorder %s15, 4
      // Predicated region
      $region21: #{tpu_custom_call.1} parent=5 // pred_check
        %p163 = pneg %p162
      $region22: #{tpu_custom_call.1} parent=5 // pred_check_branch
        %165 = sbr.rel (%p163) target = $region24
      $region23: #{tpu_custom_call.1} parent=5 // pred_region
        // Predicated region
        $region25: #{tpu_custom_call.1} parent=23 // pred_check
          %p166 = pneg %p49
        $region26: #{tpu_custom_call.1} parent=23 // pred_check_branch
          %168 = sbr.rel (%p166) target = $region28
        $region27: #{tpu_custom_call.1} parent=23 // pred_region
          %s169 = sand.u32 %s39, 1
          %s170 = scalar_lea.sflag [#allocation3], %s169
          %s171 = sand.u32 %s39, 1
          %s172 = smul.addr %s171, 8
          %s173 = scalar_lea.vmem [#allocation2], %s172
          %s175 = ssub.s32 128, 128
          %176 = vsyncadd %s170, %s175
          %s177 = sadd.s32 %s23, %s22
          %s178 = smul.addr %s177, 128
          %s179 = scalar_lea.hbm %s0, %s178
          %s181 = sshll.u32 %s173, 4
          %s182 = int_to_ptr.vmem [resolvable:$true] %s181
          %184 = dma.hbm_to_vmem [thread:$0]  %s179, 128, %s182, %s170
        $region28: #{tpu_custom_call.1} parent=23 // pred_fallthru
          _
      $region24: #{tpu_custom_call.1} parent=5 // pred_fallthru
        _
      %p185 = scmp.le.s32.totalorder 1, %s15
      %p186 = scmp.lt.s32.totalorder %s15, 5
      %p187 = pnand %p185, %p186
      %p188 = pneg %p187
      // Predicated region
      $region29: #{tpu_custom_call.1} parent=5 // pred_check
        _
      $region30: #{tpu_custom_call.1} parent=5 // pred_check_branch
        %190 = sbr.rel (%p187) target = $region32
      $region31: #{tpu_custom_call.1} parent=5 // pred_region
        %s191 = ssub.s32 %s15, 1
        %s192 = sand.u32 %s42, 1
        %s193 = scalar_lea.sflag [#allocation3], %s192
        %s194 = sand.u32 %s42, 1
        %s195 = smul.addr %s194, 8
        %s196 = scalar_lea.vmem [#allocation2], %s195
        // Predicated region
        $region33: #{tpu_custom_call.1} parent=31 // pred_check
          %p197 = pneg %p55
        $region34: #{tpu_custom_call.1} parent=31 // pred_check_branch
          %199 = sbr.rel (%p197) target = $region36
        $region35: #{tpu_custom_call.1} parent=31 // pred_region
          %200 = dma.done %s193, 128
        $region36: #{tpu_custom_call.1} parent=31 // pred_fallthru
          _
        %s201 = sand.u32 %s42, 1
        %s202 = scalar_lea.sflag [#allocation3], %s201
        %s203 = sand.u32 %s42, 1
        %s204 = smul.addr %s203, 8
        %s205 = scalar_lea.vmem [#allocation2], %s204
        %p206 = pneg %p55
        %p207 = pneg %p52
        %p208 = scmp.lt.s32.totalorder %s25, 0
        %s209 = scalar_select %p208, %s25, 0
        %s210 = scalar_lea.vmem %s1, %s209
        %p211 = pneg %p81
        %p212 = pneg %p78
        %p213 = scmp.lt.s32.totalorder %s25, 0
        %s214 = scalar_select %p213, %s25, 0
        %s215 = scalar_lea.vmem %s2, %s214
        %p216 = pneg %p107
        %p217 = pneg %p104
        %p218 = pneg %p135
        %p219 = pneg %p132
        %s220 = sand.u32 %s122, 1
        %s221 = scalar_lea.sflag [#allocation4], %s220
        %s222 = sand.u32 %s122, 1
        %s223 = smul.addr %s222, 8
        %s224 = scalar_lea.vmem [#allocation5], %s223
        %p225 = scmp.lt.s32.totalorder %s25, 0
        %s226 = scalar_select %p225, %s25, 0
        %s227 = scalar_lea.vmem %s1, %s226
        %p228 = scmp.lt.s32.totalorder %s25, 0
        %s229 = scalar_select %p228, %s25, 0
        %s230 = scalar_lea.vmem %s2, %s229
        %v231 = vld [vmem:[%s196] sm:$0xff]
        %v232 = vld [vmem:[%s227] sm:$0x1]
        %v234 = vlaneseq
        %v235 = vshrl.u32 %v234, 7
        %v236 = vsub.s32 0, %v235
        %v237 = vrot.slane %v232, %v236
        %v239 = vsub.f32 %v231, %v237
        %v240 = vld [vmem:[%s230] sm:$0x1]
        %v242 = vlaneseq
        %v243 = vshrl.u32 %v242, 7
        %v244 = vsub.s32 0, %v243
        %v245 = vrot.slane %v240, %v244
        %v247 = vmul.f32 %v239, %v245
        %v248 = vmax.f32 %v247, -1.5
        %v249 = vmin.f32 %v248, 1.5
        %250 = vst [vmem:[%s224] sm:$0xff] %v249
        %s251 = sand.u32 %s122, 1
        %s252 = scalar_lea.sflag [#allocation4], %s251
        %s253 = sand.u32 %s122, 1
        %s254 = smul.addr %s253, 8
        %s255 = scalar_lea.vmem [#allocation5], %s254
        // Predicated region
        $region37: #{tpu_custom_call.1} parent=31 // pred_check
          %p256 = pneg %p132
        $region38: #{tpu_custom_call.1} parent=31 // pred_check_branch
          %258 = sbr.rel (%p256) target = $region40
        $region39: #{tpu_custom_call.1} parent=31 // pred_region
          %s260 = ssub.s32 128, 128
          %261 = vsyncadd %s252, %s260
          %s262 = sadd.s32 %s25, %s24
          %s263 = smul.addr %s262, 128
          %s264 = scalar_lea.hbm %s3, %s263
          %s266 = sshll.u32 %s255, 4
          %s267 = int_to_ptr.vmem [resolvable:$true] %s266
          %269 = dma.vmem_to_hbm [thread:$0]  %s267, 128, %s264, %s252
        $region40: #{tpu_custom_call.1} parent=31 // pred_fallthru
          _
      $region32: #{tpu_custom_call.1} parent=5 // pred_fallthru
        _
      %p270 = scmp.le.s32.totalorder 2, %s15
      // Predicated region
      $region41: #{tpu_custom_call.1} parent=5 // pred_check
        %p271 = pneg %p270
      $region42: #{tpu_custom_call.1} parent=5 // pred_check_branch
        %273 = sbr.rel (%p271) target = $region44
      $region43: #{tpu_custom_call.1} parent=5 // pred_region
        %s274 = ssub.s32 %s15, 2
        // Predicated region
        $region45: #{tpu_custom_call.1} parent=43 // pred_check
          %p275 = pneg %p138
        $region46: #{tpu_custom_call.1} parent=43 // pred_check_branch
          %277 = sbr.rel (%p275) target = $region48
        $region47: #{tpu_custom_call.1} parent=43 // pred_region
          %s278 = sand.u32 %s123, 1
          %s279 = scalar_lea.sflag [#allocation4], %s278
          %s280 = sand.u32 %s123, 1
          %s281 = smul.addr %s280, 8
          %s282 = scalar_lea.vmem [#allocation5], %s281
          %283 = dma.done %s279, 128
        $region48: #{tpu_custom_call.1} parent=43 // pred_fallthru
          _
      $region44: #{tpu_custom_call.1} parent=5 // pred_fallthru
        _
    $region6: #{tpu_custom_call.1} parent=1 // loop_footer
      %s19 = sadd.s32 1, %s15
    $region7: #{tpu_custom_call.1} parent=1 // loop_footer_branch
      %14 = sbr.rel target = $region3
    $region8: #{tpu_custom_call.1} parent=1 // loop_exit
      _
    %284 = vsyncpa [#allocation3], 1
    %s285 = scalar_lea.sflag [#allocation3], 1
    %286 = vsyncpa %s285, 1
    %287 = vsyncpa [#allocation4], 1
    %s288 = scalar_lea.sflag [#allocation4], 1
    %289 = vsyncpa %s288, 1

</llo_original>
